<compile_context>
chip_gen: v7x
topology: tpu7x:2x2x1
jax: 0.10.0
libtpu: 0.0.40
codegen_flags: <defaults>
</compile_context>

<pallas_src>
import jax
import jax.numpy as jnp
from jax.experimental import pallas as pl
from jax.experimental.pallas import tpu as pltpu


def mlp_kernel(x_ref, w1_ref, b1_ref, w2_ref, b2_ref, o_ref):
    # X arrives f32 straight from HBM; cast to bf16 on the VPU (free under the
    # mem-bound regime), matmul on the MXU with f32 accumulation.
    x = x_ref[...].astype(jnp.bfloat16)
    h = jnp.dot(x, w1_ref[...], preferred_element_type=jnp.float32)
    # f32 epilogue (bias + ReLU): native VALU path on all generations (incl. v5e).
    h = jnp.maximum(h + b1_ref[...], 0.0)
    # Second layer: bf16 operands, f32 accumulation, unpadded (tb, 10) store.
    o = jnp.dot(h.astype(jnp.bfloat16), w2_ref[...],
                preferred_element_type=jnp.float32)
    o_ref[...] = o + b2_ref[...]


def _round_up(x, m):
    return ((x + m - 1) // m) * m


def prepare_params(w1, b1, w2, b2):
    """One-time param prep: cast matmul weights to bf16, biases to f32 rows."""
    w1_bf = w1.astype(jnp.bfloat16)                  # (20, 256)
    b1_f = b1.reshape(1, -1).astype(jnp.float32)     # (1, 256)
    w2_bf = w2.astype(jnp.bfloat16)                  # (256, 10)
    b2_f = b2.reshape(1, -1).astype(jnp.float32)     # (1, 10)
    return w1_bf, b1_f, w2_bf, b2_f


def mlp_forward(x, params, *, max_batch_tile=512):
    """x: (batch, 20) f32. params: output of prepare_params. Returns (batch, 10) f32."""
    w1_bf, b1_f, w2_bf, b2_f = params
    batch, k = x.shape
    hidden = w1_bf.shape[1]
    out_dim = w2_bf.shape[1]

    if batch <= max_batch_tile:
        # Fast path: one block, whole problem in VMEM, zero wrapper padding.
        # Block dims equal the full array dims, so the (8,128) rule is satisfied.
        tb = batch
        batch_p = batch
        x_p = x
    else:
        # Large batch: 512-row tiles (multiple of 16 -> native bf16 (16,128)
        # tiling after the in-kernel cast); batch > 512 gives >= 2 grid steps
        # so the "parallel" axis actually splits across v7x's two TensorCores.
        tb = max_batch_tile
        batch_p = _round_up(batch, tb)
        x_p = jnp.pad(x, ((0, batch_p - batch), (0, 0))) if batch_p != batch else x

    grid = (batch_p // tb,)

    out_p = pl.pallas_call(
        mlp_kernel,
        out_shape=jax.ShapeDtypeStruct((batch_p, out_dim), jnp.float32),
        grid=grid,
        in_specs=[
            pl.BlockSpec((tb, k), lambda i: (i, 0)),        # X: unpadded, streamed
            pl.BlockSpec((k, hidden), lambda i: (0, 0)),    # W1: VMEM-resident
            pl.BlockSpec((1, hidden), lambda i: (0, 0)),    # b1: resident
            pl.BlockSpec((hidden, out_dim), lambda i: (0, 0)),  # W2: resident
            pl.BlockSpec((1, out_dim), lambda i: (0, 0)),   # b2: resident
        ],
        out_specs=pl.BlockSpec((tb, out_dim), lambda i: (i, 0)),
        compiler_params=pltpu.CompilerParams(
            dimension_semantics=("parallel",)),
    )(x_p, w1_bf, b1_f, w2_bf, b2_f)

    return out_p[:batch] if batch_p != batch else out_p


def init_params(key):
    # Deterministic init mirroring nn.Linear's U(-1/sqrt(fan_in), 1/sqrt(fan_in)).
    k1, k2, k3, k4 = jax.random.split(key, 4)
    lim1 = 1.0 / jnp.sqrt(20.0)
    lim2 = 1.0 / jnp.sqrt(256.0)
    w1 = jax.random.uniform(k1, (20, 256), jnp.float32, -lim1, lim1)
    b1 = jax.random.uniform(k2, (1, 256), jnp.float32, -lim1, lim1)
    w2 = jax.random.uniform(k3, (256, 10), jnp.float32, -lim2, lim2)
    b2 = jax.random.uniform(k4, (1, 10), jnp.float32, -lim2, lim2)
    return w1, b1, w2, b2


if __name__ == "__main__":
    key = jax.random.PRNGKey(0)
    kx, kp = jax.random.split(key)
    x = jax.random.uniform(kx, (2, 20), jnp.float32)  # matches torch.rand(2, 20)
    w1, b1, w2, b2 = init_params(kp)
    params = prepare_params(w1, b1, w2, b2)           # one-time weight prep

    out = mlp_forward(x, params)
    out = jax.block_until_ready(out)
    assert out.shape == (2, 10)

    # Reference matching the kernel's numerics (bf16 operands, f32 accumulation).
    xb = x.astype(jnp.bfloat16).astype(jnp.float32)
    w1b = w1.astype(jnp.bfloat16).astype(jnp.float32)
    w2b = w2.astype(jnp.bfloat16).astype(jnp.float32)
    h_ref = jnp.maximum(xb @ w1b + b1, 0.0)
    ref_bf16 = h_ref.astype(jnp.bfloat16).astype(jnp.float32) @ w2b + b2
    assert jnp.allclose(out, ref_bf16, atol=1e-3), "mismatch vs bf16-path reference"

    # Loose sanity check against the pure-f32 forward (semantics of the module).
    ref_f32 = jnp.maximum(x @ w1 + b1, 0.0) @ w2 + b2
    assert jnp.allclose(out, ref_f32, atol=5e-2), "mismatch vs f32 reference"

    # Also exercise the tiled (multi-grid-step) path once for coverage.
    xl = jax.random.uniform(jax.random.PRNGKey(1), (1040, 20), jnp.float32)
    out_l = jax.block_until_ready(mlp_forward(xl, params))
    assert out_l.shape == (1040, 10)

    print("KERNEL_OK")
</pallas_src>

<mosaic_0001>
module attributes {stable_mosaic.version = 11 : i64} {
  func.func @mlp_kernel(%arg0: i32, %arg1: memref<2x20xf32, #tpu.memory_space<vmem>>, %arg2: memref<20x256xbf16, #tpu.memory_space<vmem>>, %arg3: memref<1x256xf32, #tpu.memory_space<vmem>>, %arg4: memref<256x10xbf16, #tpu.memory_space<vmem>>, %arg5: memref<1x10xf32, #tpu.memory_space<vmem>>, %arg6: memref<2x10xf32, #tpu.memory_space<vmem>>) attributes {dimension_semantics = [#tpu.dimension_semantics<parallel>], iteration_bounds = array<i64: 1>, scalar_prefetch = 0 : i64, scratch_operands = 0 : i64, tpu.core_type = #tpu.core_type<tc>, window_params = [{transform_indices = @transform_0, window_bounds = array<i64: 2, 20>}, {pipeline_mode = #tpu.pipeline_mode<synchronous>, transform_indices = @transform_1, window_bounds = array<i64: 20, 256>}, {pipeline_mode = #tpu.pipeline_mode<synchronous>, transform_indices = @transform_2, window_bounds = array<i64: 1, 256>}, {pipeline_mode = #tpu.pipeline_mode<synchronous>, transform_indices = @transform_3, window_bounds = array<i64: 256, 10>}, {pipeline_mode = #tpu.pipeline_mode<synchronous>, transform_indices = @transform_4, window_bounds = array<i64: 1, 10>}, {transform_indices = @transform_5, window_bounds = array<i64: 2, 10>}]} {
    %c0 = arith.constant 0 : index
    %c0_0 = arith.constant 0 : index
    %0 = vector.load %arg1[%c0, %c0_0] : memref<2x20xf32, #tpu.memory_space<vmem>>, vector<2x20xf32>
    %1 = arith.truncf %0 : vector<2x20xf32> to vector<2x20xbf16>
    %c0_1 = arith.constant 0 : index
    %c0_2 = arith.constant 0 : index
    %2 = vector.load %arg2[%c0_1, %c0_2] : memref<20x256xbf16, #tpu.memory_space<vmem>>, vector<20x256xbf16>
    %cst = arith.constant dense<0.000000e+00> : vector<2x256xf32>
    %3 = tpu.matmul %1, %2, %cst {dimension_numbers = #tpu.dot_dimension_numbers<[1], [0], [0], [1], [0, 0, 1, 1], [], []>} : vector<2x20xbf16>, vector<20x256xbf16>, vector<2x256xf32> -> vector<2x256xf32>
    %c0_3 = arith.constant 0 : index
    %c0_4 = arith.constant 0 : index
    %4 = vector.load %arg3[%c0_3, %c0_4] : memref<1x256xf32, #tpu.memory_space<vmem>>, vector<1x256xf32>
    %5 = vector.broadcast %4 : vector<1x256xf32> to vector<2x256xf32>
    %6 = arith.addf %3, %5 : vector<2x256xf32>
    %cst_5 = arith.constant 0.000000e+00 : f32
    %7 = vector.broadcast %cst_5 : f32 to vector<2x256xf32>
    %8 = arith.maximumf %6, %7 : vector<2x256xf32>
    %9 = arith.truncf %8 : vector<2x256xf32> to vector<2x256xbf16>
    %c0_6 = arith.constant 0 : index
    %c0_7 = arith.constant 0 : index
    %10 = vector.load %arg4[%c0_6, %c0_7] : memref<256x10xbf16, #tpu.memory_space<vmem>>, vector<256x10xbf16>
    %cst_8 = arith.constant dense<0.000000e+00> : vector<2x10xf32>
    %11 = tpu.matmul %9, %10, %cst_8 {dimension_numbers = #tpu.dot_dimension_numbers<[1], [0], [0], [1], [0, 0, 1, 1], [], []>} : vector<2x256xbf16>, vector<256x10xbf16>, vector<2x10xf32> -> vector<2x10xf32>
    %c0_9 = arith.constant 0 : index
    %c0_10 = arith.constant 0 : index
    %12 = vector.load %arg5[%c0_9, %c0_10] : memref<1x10xf32, #tpu.memory_space<vmem>>, vector<1x10xf32>
    %13 = vector.broadcast %12 : vector<1x10xf32> to vector<2x10xf32>
    %14 = arith.addf %11, %13 : vector<2x10xf32>
    %c0_11 = arith.constant 0 : index
    %c0_12 = arith.constant 0 : index
    %15 = vector.load %arg6[%c0_11, %c0_12] : memref<2x10xf32, #tpu.memory_space<vmem>>, vector<2x10xf32>
    tpu.vector_store %arg6[%c0_11, %c0_12], %14 {strides = array<i32>} : memref<2x10xf32, #tpu.memory_space<vmem>>, vector<2x10xf32>,
    return
  }
  func.func @transform_0(%arg0: i32) -> (i32, i32) {
    %c0_i32 = arith.constant 0 : i32
    %c0_i32_0 = arith.constant 0 : i32
    return %arg0, %c0_i32 : i32, i32
  }
  func.func @transform_1(%arg0: i32) -> (i32, i32) {
    %c0_i32 = arith.constant 0 : i32
    %c0_i32_0 = arith.constant 0 : i32
    %c0_i32_1 = arith.constant 0 : i32
    return %c0_i32, %c0_i32_0 : i32, i32
  }
  func.func @transform_2(%arg0: i32) -> (i32, i32) {
    %c0_i32 = arith.constant 0 : i32
    %c0_i32_0 = arith.constant 0 : i32
    %c0_i32_1 = arith.constant 0 : i32
    return %c0_i32, %c0_i32_0 : i32, i32
  }
  func.func @transform_3(%arg0: i32) -> (i32, i32) {
    %c0_i32 = arith.constant 0 : i32
    %c0_i32_0 = arith.constant 0 : i32
    %c0_i32_1 = arith.constant 0 : i32
    return %c0_i32, %c0_i32_0 : i32, i32
  }
  func.func @transform_4(%arg0: i32) -> (i32, i32) {
    %c0_i32 = arith.constant 0 : i32
    %c0_i32_0 = arith.constant 0 : i32
    %c0_i32_1 = arith.constant 0 : i32
    return %c0_i32, %c0_i32_0 : i32, i32
  }
  func.func @transform_5(%arg0: i32) -> (i32, i32) {
    %c0_i32 = arith.constant 0 : i32
    %c0_i32_0 = arith.constant 0 : i32
    return %arg0, %c0_i32 : i32, i32
  }
}

</mosaic_0001>

<llo_original>
// kernel: tpu_custom_call.1
$region0: #{tpu_custom_call.1}
  #allocation0 [shape = 'u32[]', space=smem, size = 0x4, offset = 0x4, fixed_abs, tag = 'smem constant byte address 0x4 - core index']
  #allocation1 [shape = 'u32[144,128]{1,0:T(1,128)}', space=vmem, size = 0x12000, scoped, tag = 'internal scratch']
  %s0 = inlined_call_operand.vmem [shape: f32[2,20], index: 0, kind: input, shape index: {}]
  %s1 = inlined_call_operand.vmem [shape: bf16[20,256], index: 1, kind: input, shape index: {}]
  %s2 = inlined_call_operand.vmem [shape: f32[1,256], index: 2, kind: input, shape index: {}]
  %s3 = inlined_call_operand.vmem [shape: bf16[256,10], index: 3, kind: input, shape index: {}]
  %s4 = inlined_call_operand.vmem [shape: f32[1,10], index: 4, kind: input, shape index: {}]
  %s5 = inlined_call_operand.hbm [shape: f32[2,10], index: 5, kind: output, shape index: {}]
  %s6 = sld [smem:[#allocation0]]
  $region30: #{tpu_custom_call.1} parent=0
    _
  %s8 = ssub.s32 1, %s6
  %s9 = scalar_select 0, %s8, %s6
  $region1: #{tpu_custom_call.1} parent=0
    #allocation2 [shape = 'u8[1024]{0}', space=vmem, size = 0x400, scoped, tag = 'output window, operand 0, single buffered']
    #allocation3 [shape = 's32[1]{0}', space=sflag, size = 0x4, scoped, tag = 'scoped memory for tpu_custom_call.1']
    %10 = vsyncpa [#allocation3], 0
    // Predicated region
    $region2: #{tpu_custom_call.1} parent=1 // pred_check
      _
    $region3: #{tpu_custom_call.1} parent=1 // pred_check_branch
      %12 = sbr.rel (0) target = $region5
    $region4: #{tpu_custom_call.1} parent=1 // pred_region
      _
    $region5: #{tpu_custom_call.1} parent=1 // pred_fallthru
      _
    // Predicated region
    $region6: #{tpu_custom_call.1} parent=1 // pred_check
      _
    $region7: #{tpu_custom_call.1} parent=1 // pred_check_branch
      %14 = sbr.rel (0) target = $region9
    $region8: #{tpu_custom_call.1} parent=1 // pred_region
      _
    $region9: #{tpu_custom_call.1} parent=1 // pred_fallthru
      _
    // Predicated region
    $region10: #{tpu_custom_call.1} parent=1 // pred_check
      _
    $region11: #{tpu_custom_call.1} parent=1 // pred_check_branch
      %16 = sbr.rel (0) target = $region13
    $region12: #{tpu_custom_call.1} parent=1 // pred_region
      _
    $region13: #{tpu_custom_call.1} parent=1 // pred_fallthru
      _
    // Predicated region
    $region14: #{tpu_custom_call.1} parent=1 // pred_check
      _
    $region15: #{tpu_custom_call.1} parent=1 // pred_check_branch
      %18 = sbr.rel (0) target = $region17
    $region16: #{tpu_custom_call.1} parent=1 // pred_region
      _
    $region17: #{tpu_custom_call.1} parent=1 // pred_fallthru
      _
    // Predicated region
    $region18: #{tpu_custom_call.1} parent=1 // pred_check
      _
    $region19: #{tpu_custom_call.1} parent=1 // pred_check_branch
      %20 = sbr.rel (0) target = $region21
    $region20: #{tpu_custom_call.1} parent=1 // pred_region
      _
    $region21: #{tpu_custom_call.1} parent=1 // pred_fallthru
      _
    %v22 = vld [vmem:[%s0] sm:$0x3]
    %v23 = vpack.c.bf16 %v22, %v22
    %v24 = vld [vmem:[%s1] sm:$0xff]
    %v25 = vld [vmem:[%s1 + $0x8] sm:$0xff]
    %v26 = vld [vmem:[%s1 + $0x10] sm:$0x33]
    %v27 = vld [vmem:[%s2] sm:$0x3]
    %v29 = vlaneseq
    %v30 = vshrl.u32 %v29, 7
    %v31 = vsub.s32 0, %v30
    %v32 = vrot.slane %v27, %v31
    %v33 = vlaneseq
    %v34 = vshrl.u32 %v33, 7
    %v35 = vsub.s32 1, %v34
    %v36 = vrot.slane %v27, %v35
    %v42 = vunpack.c.l.b16 %v24
    %v43 = vunpack.c.h.b16 %v24
    %v44 = vunpack.c.l.b16 %v25
    %v45 = vunpack.c.h.b16 %v25
    %v46 = vunpack.c.l.b16 %v26
    %v47 = vunpack.c.h.b16 %v26
    %v48 = vpack.c.b16 %v44, %v42
    %v49 = vpack.c.b16 %v45, %v43
    %v50 = vpack.c.b16 %v46, %v46
    %v51 = vpack.c.b16 %v47, %v47
    %vm54 = vcmask 162816
    %v56 = vsel %vm54, %v23, 0
    %vm58 = vcmask 1041408
    %v60 = vsel %vm58, %v50, 0
    %v63 = vsel %vm58, %v51, 0
    %65 = vmatprep.subr.bf16.mxu0 %v49
    %66 = vmatpush1.bf16.msra.mxu0 %v48
    %67 = vmatprep.subr.bf16.mxu0 %v63
    %68 = vmatpush1.bf16.msra.mxu0 %v60
    %69 = vmatprep.subr.bf16.mxu0 0
    %70 = vmatpush1.bf16.msra.mxu0 0
    %71 = vmatprep.subr.bf16.mxu0 0
    %72 = vmatpush1.bf16.msra.mxu0 0
    %73 = vmatprep.subr.bf16.mxu0 0
    %74 = vmatpush1.bf16.msra.mxu0 0
    %75 = vmatprep.subr.bf16.mxu0 0
    %76 = vmatpush1.bf16.msra.mxu0 0
    %77 = vmatprep.subr.bf16.mxu0 0
    %78 = vmatpush1.bf16.msra.mxu0 0
    %79 = vmatprep.subr.bf16.mxu0 0
    %80 = vmatpush1.bf16.msra.mxu0 0
    %81 = vmatprep.subr.bf16.mxu0 0
    %82 = vmatpush1.bf16.msra.mxu0 0
    %83 = vmatprep.subr.bf16.mxu0 0
    %84 = vmatpush1.bf16.msra.mxu0 0
    %85 = vmatprep.subr.bf16.mxu0 0
    %86 = vmatpush1.bf16.msra.mxu0 0
    %87 = vmatprep.subr.bf16.mxu0 0
    %88 = vmatpush1.bf16.msra.mxu0 0
    %89 = vmatprep.subr.bf16.mxu0 0
    %90 = vmatpush1.bf16.msra.mxu0 0
    %91 = vmatprep.subr.bf16.mxu0 0
    %92 = vmatpush1.bf16.msra.mxu0 0
    %93 = vmatprep.subr.bf16.mxu0 0
    %94 = vmatpush1.bf16.msra.mxu0 0
    %95 = vmatprep.subr.bf16.mxu0 0
    %96 = vmatpush1.bf16.msra.mxu0 0
    %97 = vmatprep.mubr.bf16.mxu0 0
    %98 = vmatmul.mubr.bf16.gmra.mrb[0].mxu0 %v56
    %v99 = vpop.f32.mrb[0].mxu0
    %v100 = vadd.f32 %v32, %v99
    %v101 = vpop.f32.mrb[0].mxu0
    %v102 = vadd.f32 %v36, %v101
    %v103 = vpop.f32.mrb[0].mxu0
    %v104 = vpop.f32.mrb[0].mxu0
    %105 = vdwg.mxu0
    %v106 = vmax.f32 %v100, 0.0
    %v107 = vmax.f32 %v102, 0.0
    %v108 = vpack.c.bf16 %v106, %v106
    %v109 = vpack.c.bf16 %v107, %v107
    %v110 = vld [vmem:[%s3] sm:$0xf]
    %v111 = vld [vmem:[%s3 + $0x4] sm:$0xf]
    %v112 = vld [vmem:[%s3 + $0x8] sm:$0xf]
    %v113 = vld [vmem:[%s3 + $0xc] sm:$0xf]
    %v114 = vld [vmem:[%s3 + $0x10] sm:$0xf]
    %v115 = vld [vmem:[%s3 + $0x14] sm:$0xf]
    %v116 = vld [vmem:[%s3 + $0x18] sm:$0xf]
    %v117 = vld [vmem:[%s3 + $0x1c] sm:$0xf]
    %v118 = vld [vmem:[%s3 + $0x20] sm:$0xf]
    %v119 = vld [vmem:[%s3 + $0x24] sm:$0xf]
    %v120 = vld [vmem:[%s3 + $0x28] sm:$0xf]
    %v121 = vld [vmem:[%s3 + $0x2c] sm:$0xf]
    %v122 = vld [vmem:[%s3 + $0x30] sm:$0xf]
    %v123 = vld [vmem:[%s3 + $0x34] sm:$0xf]
    %v124 = vld [vmem:[%s3 + $0x38] sm:$0xf]
    %v125 = vld [vmem:[%s3 + $0x3c] sm:$0xf]
    %v126 = vld [vmem:[%s3 + $0x40] sm:$0xf]
    %v127 = vld [vmem:[%s3 + $0x44] sm:$0xf]
    %v128 = vld [vmem:[%s3 + $0x48] sm:$0xf]
    %v129 = vld [vmem:[%s3 + $0x4c] sm:$0xf]
    %v130 = vld [vmem:[%s3 + $0x50] sm:$0xf]
    %v131 = vld [vmem:[%s3 + $0x54] sm:$0xf]
    %v132 = vld [vmem:[%s3 + $0x58] sm:$0xf]
    %v133 = vld [vmem:[%s3 + $0x5c] sm:$0xf]
    %v134 = vld [vmem:[%s3 + $0x60] sm:$0xf]
    %v135 = vld [vmem:[%s3 + $0x64] sm:$0xf]
    %v136 = vld [vmem:[%s3 + $0x68] sm:$0xf]
    %v137 = vld [vmem:[%s3 + $0x6c] sm:$0xf]
    %v138 = vld [vmem:[%s3 + $0x70] sm:$0xf]
    %v139 = vld [vmem:[%s3 + $0x74] sm:$0xf]
    %v140 = vld [vmem:[%s3 + $0x78] sm:$0xf]
    %v141 = vld [vmem:[%s3 + $0x7c] sm:$0xf]
    %v142 = vld [vmem:[%s4] sm:$0x1]
    %v144 = vlaneseq
    %v145 = vshrl.u32 %v144, 7
    %v146 = vsub.s32 0, %v145
    %v147 = vrot.slane %v142, %v146
    %v181 = vunpack.c.l.b16 %v110
    %v182 = vunpack.c.l.b16 %v111
    %v183 = vunpack.c.l.b16 %v112
    %v184 = vunpack.c.l.b16 %v113
    %v185 = vunpack.c.l.b16 %v114
    %v186 = vunpack.c.l.b16 %v115
    %v187 = vunpack.c.l.b16 %v116
    %v188 = vunpack.c.l.b16 %v117
    %v189 = vunpack.c.l.b16 %v118
    %v190 = vunpack.c.l.b16 %v119
    %v191 = vunpack.c.l.b16 %v120
    %v192 = vunpack.c.l.b16 %v121
    %v193 = vunpack.c.l.b16 %v122
    %v194 = vunpack.c.l.b16 %v123
    %v195 = vunpack.c.l.b16 %v124
    %v196 = vunpack.c.l.b16 %v125
    %v197 = vunpack.c.l.b16 %v126
    %v198 = vunpack.c.l.b16 %v127
    %v199 = vunpack.c.l.b16 %v128
    %v200 = vunpack.c.l.b16 %v129
    %v201 = vunpack.c.l.b16 %v130
    %v202 = vunpack.c.l.b16 %v131
    %v203 = vunpack.c.l.b16 %v132
    %v204 = vunpack.c.l.b16 %v133
    %v205 = vunpack.c.l.b16 %v134
    %v206 = vunpack.c.l.b16 %v135
    %v207 = vunpack.c.l.b16 %v136
    %v208 = vunpack.c.l.b16 %v137
    %v209 = vunpack.c.l.b16 %v138
    %v210 = vunpack.c.l.b16 %v139
    %v211 = vunpack.c.l.b16 %v140
    %v212 = vunpack.c.l.b16 %v141
    %v213 = vpack.c.b16 %v182, %v181
    %v214 = vpack.c.b16 %v184, %v183
    %v215 = vpack.c.b16 %v186, %v185
    %v216 = vpack.c.b16 %v188, %v187
    %v217 = vpack.c.b16 %v190, %v189
    %v218 = vpack.c.b16 %v192, %v191
    %v219 = vpack.c.b16 %v194, %v193
    %v220 = vpack.c.b16 %v196, %v195
    %v221 = vpack.c.b16 %v198, %v197
    %v222 = vpack.c.b16 %v200, %v199
    %v223 = vpack.c.b16 %v202, %v201
    %v224 = vpack.c.b16 %v204, %v203
    %v225 = vpack.c.b16 %v206, %v205
    %v226 = vpack.c.b16 %v208, %v207
    %v227 = vpack.c.b16 %v210, %v209
    %v228 = vpack.c.b16 %v212, %v211
    %245 = vmatprep.subr.bf16.mxu0 0
    %246 = vmatpush1.bf16.msra.mxu0 %v213
    %247 = vmatprep.subr.bf16.mxu0 0
    %248 = vmatpush1.bf16.msra.mxu0 %v214
    %249 = vmatprep.subr.bf16.mxu0 0
    %250 = vmatpush1.bf16.msra.mxu0 %v215
    %251 = vmatprep.subr.bf16.mxu0 0
    %252 = vmatpush1.bf16.msra.mxu0 %v216
    %253 = vmatprep.subr.bf16.mxu0 0
    %254 = vmatpush1.bf16.msra.mxu0 %v217
    %255 = vmatprep.subr.bf16.mxu0 0
    %256 = vmatpush1.bf16.msra.mxu0 %v218
    %257 = vmatprep.subr.bf16.mxu0 0
    %258 = vmatpush1.bf16.msra.mxu0 %v219
    %259 = vmatprep.subr.bf16.mxu0 0
    %260 = vmatpush1.bf16.msra.mxu0 %v220
    %261 = vmatprep.subr.bf16.mxu0 0
    %262 = vmatpush1.bf16.msra.mxu0 %v221
    %263 = vmatprep.subr.bf16.mxu0 0
    %264 = vmatpush1.bf16.msra.mxu0 %v222
    %265 = vmatprep.subr.bf16.mxu0 0
    %266 = vmatpush1.bf16.msra.mxu0 %v223
    %267 = vmatprep.subr.bf16.mxu0 0
    %268 = vmatpush1.bf16.msra.mxu0 %v224
    %269 = vmatprep.subr.bf16.mxu0 0
    %270 = vmatpush1.bf16.msra.mxu0 %v225
    %271 = vmatprep.subr.bf16.mxu0 0
    %272 = vmatpush1.bf16.msra.mxu0 %v226
    %273 = vmatprep.subr.bf16.mxu0 0
    %274 = vmatpush1.bf16.msra.mxu0 %v227
    %275 = vmatprep.subr.bf16.mxu0 0
    %276 = vmatpush1.bf16.msra.mxu0 %v228
    %277 = vmatprep.mubr.bf16.mxu0 %v109
    %278 = vmatmul.mubr.bf16.gmra.mrb[0].mxu0 %v108
    %v279 = vpop.f32.mrb[0].mxu0
    %v280 = vadd.f32 %v147, %v279
    %v281 = vpop.f32.mrb[0].mxu0
    %v282 = vpop.f32.mrb[0].mxu0
    %v283 = vpop.f32.mrb[0].mxu0
    %284 = vdwg.mxu0
    %vm285 = vcmask 74752
    %286 = vst.msk [vmem:[#allocation2] sm:$0x3] %vm285, %v280
    // Predicated region
    $region22: #{tpu_custom_call.1} parent=1 // pred_check
      _
    $region23: #{tpu_custom_call.1} parent=1 // pred_check_branch
      %288 = sbr.rel (0) target = $region25
    $region24: #{tpu_custom_call.1} parent=1 // pred_region
      %s290 = ssub.s32 32, 32
      %291 = vsyncadd [#allocation3], %s290
      %s293 = sshll.u32 [#allocation2], 4
      %s294 = int_to_ptr.vmem [resolvable:$true] %s293
      %296 = dma.vmem_to_hbm [thread:$0]  %s294, 32, %s5, [#allocation3]
    $region25: #{tpu_custom_call.1} parent=1 // pred_fallthru
      _
    // Predicated region
    $region26: #{tpu_custom_call.1} parent=1 // pred_check
      _
    $region27: #{tpu_custom_call.1} parent=1 // pred_check_branch
      %298 = sbr.rel (0) target = $region29
    $region28: #{tpu_custom_call.1} parent=1 // pred_region
      %299 = dma.done [#allocation3], 32
    $region29: #{tpu_custom_call.1} parent=1 // pred_fallthru
      _
    %300 = vsyncpa [#allocation3], 1

</llo_original>
